<compile_context>
chip_gen: v6e
topology: v6e:2x2x1
jax: 0.10.0
libtpu: 0.0.40
codegen_flags: <defaults>
</compile_context>

<pallas_src>
import functools

import jax
import jax.numpy as jnp
from jax.experimental import pallas as pl
from jax.experimental.pallas import tpu as pltpu


def _round_up(x, m):
    return (x + m - 1) // m * m


def _textcnn_fused_kernel(ids_ref, w_ref, b_ref, tlim_ref, out_ref, *, fs_max):
    """Fused TextCNN head for one batch tile.

    ids_ref:  (bt, l_pad)      int32   token ids (zero padded)
    w_ref:    (k_fold, f_pad)  bf16    folded (embedding @ conv) weights, k = tap*v_pad + vocab
    b_ref:    (1, f_pad)       float32 conv biases (zero padded)
    tlim_ref: (1, f_pad)       int32   last valid conv position per output column (L - fs), -1 for pad cols
    out_ref:  (bt, f_pad)      float32 max-pooled activations
    """
    bt, l_pad = ids_ref.shape
    k_fold, f_pad = w_ref.shape
    v_pad = k_fold // fs_max
    t_pad = l_pad - (fs_max - 1)          # padded number of conv positions (tile aligned)

    ids = ids_ref[...]                    # (bt, l_pad) int32

    # One-hot im2col of the token windows, built at full lane width with iota
    # compares:  column c = k * v_pad + v  is 1  iff  ids[b, t + k] == v.
    c_iota = jax.lax.broadcasted_iota(jnp.int32, (bt, t_pad, k_fold), 2)
    hit = c_iota == ids[:, 0:t_pad][:, :, None]                       # tap k = 0
    for k in range(1, fs_max):            # fs_max is a small static int -> unrolled
        tap = ids[:, k:k + t_pad]                                     # (bt, t_pad)
        hit = jnp.logical_or(hit, c_iota == (tap[:, :, None] + k * v_pad))
    oh = hit.astype(w_ref.dtype)          # (bt, t_pad, k_fold), exact 0/1

    # Single MXU pass: native-depth contraction (K = fs_max * v_pad), f32
    # accumulation, lane-dense N = f_pad.
    acc = jnp.dot(oh.reshape(bt * t_pad, k_fold), w_ref[...],
                  preferred_element_type=jnp.float32)
    acc = acc + b_ref[...]                # conv bias (f32)
    acc = jnp.maximum(acc, 0.0)           # ReLU
    acc = acc.reshape(bt, t_pad, f_pad)

    # Mask conv positions that are out of range for each column's filter size,
    # then max-pool over time.  After ReLU everything is >= 0, so masking with
    # 0 is exact as long as L >= max(filter_sizes) (asserted in the wrapper).
    t_iota = jax.lax.broadcasted_iota(jnp.int32, (bt, t_pad, f_pad), 1)
    valid = t_iota <= tlim_ref[...][None]            # (1, 1, f_pad) broadcast
    acc = jnp.where(valid, acc, 0.0)
    out_ref[...] = jnp.max(acc, axis=1)              # (bt, f_pad)


def textcnn_forward(text, emb_table, conv_weights, conv_biases, filter_sizes,
                    *, block_b=128, compute_dtype=jnp.bfloat16,
                    vmem_limit_bytes=None):
    """Fused TextCNN forward.

    text:          (B, L) integer token ids
    emb_table:     (V, D) float32 embedding table (padding_idx row already zero)
    conv_weights:  list of PyTorch-layout Conv2d weights, shape (F_i, 1, fs_i, D)
    conv_biases:   list of (F_i,) float32 biases
    filter_sizes:  tuple of fs_i
    Returns (B, sum_i F_i) float32, matching the PyTorch module's output.
    """
    text = jnp.asarray(text, jnp.int32)
    B, L = text.shape
    V, D = emb_table.shape

    fs_max = int(max(filter_sizes))
    fs_min = int(min(filter_sizes))
    assert L >= fs_max, "sequence must be at least as long as the largest filter"

    f_sizes = [int(w.shape[0]) for w in conv_weights]
    F_total = sum(f_sizes)
    F_pad = _round_up(F_total, 128)            # lane-dense matmul N axis / output store
    V_pad = _round_up(V, 64)                   # keeps K_fold a multiple of 128 for fs_max >= 2
    K_fold = fs_max * V_pad

    T_pad = _round_up(L - fs_min + 1, 16)      # tile-aligned conv-position count
    L_pad = T_pad + fs_max - 1                 # every fs_max-wide window stays in range

    # ---- Host-side parameter repack (done once, like any weight-layout prep). ----
    # Fold the embedding table into each conv tap: emb_table[id] @ w[k] == (emb_table @ w[k])[id].
    table_pad = jnp.zeros((V_pad, D), jnp.float32).at[:V].set(
        jnp.asarray(emb_table, jnp.float32))
    w_fold = jnp.zeros((fs_max, V_pad, F_pad), jnp.float32)
    bias = jnp.zeros((1, F_pad), jnp.float32)
    t_limit = jnp.full((1, F_pad), -1, jnp.int32)   # padded columns: always masked -> 0
    col = 0
    for fs, w, b in zip(filter_sizes, conv_weights, conv_biases):
        f = int(w.shape[0])
        w_kdf = jnp.transpose(jnp.asarray(w, jnp.float32)[:, 0, :, :], (1, 2, 0))  # (fs, D, f)
        folded = jnp.einsum("vd,kdf->kvf", table_pad, w_kdf)                       # (fs, V_pad, f)
        w_fold = w_fold.at[:fs, :, col:col + f].set(folded)                        # taps >= fs stay 0
        bias = bias.at[0, col:col + f].set(jnp.asarray(b, jnp.float32))
        t_limit = t_limit.at[0, col:col + f].set(L - fs)
        col += f
    w_fold = w_fold.reshape(K_fold, F_pad).astype(compute_dtype)

    # ---- Batch tiling (double-buffered by the BlockSpec pipeline). ----
    bt = _round_up(max(8, min(int(block_b), _round_up(B, 8))), 8)
    B_pad = _round_up(B, bt)
    # Pad token 0 is harmless: padded time positions are either masked or hit zero taps,
    # padded batch rows are sliced off below.
    ids = jnp.pad(text, ((0, B_pad - B), (0, L_pad - L)))

    out = pl.pallas_call(
        functools.partial(_textcnn_fused_kernel, fs_max=fs_max),
        out_shape=jax.ShapeDtypeStruct((B_pad, F_pad), jnp.float32),
        grid=(B_pad // bt,),
        in_specs=[
            pl.BlockSpec((bt, L_pad), lambda i: (i, 0)),        # token ids: batch-tiled
            pl.BlockSpec((K_fold, F_pad), lambda i: (0, 0)),    # folded weights: VMEM resident
            pl.BlockSpec((1, F_pad), lambda i: (0, 0)),         # bias: VMEM resident
            pl.BlockSpec((1, F_pad), lambda i: (0, 0)),         # per-column time limit: resident
        ],
        out_specs=pl.BlockSpec((bt, F_pad), lambda i: (i, 0)),
        compiler_params=pltpu.CompilerParams(
            dimension_semantics=("parallel",),                  # megacore-shard the batch axis
            vmem_limit_bytes=vmem_limit_bytes,
        ),
    )(ids, w_fold, bias, t_limit)

    # torch.cat(pooled, dim=1).squeeze(-1).squeeze(-1)
    return out[:B, :F_total]


def _reference_forward(text, emb_table, conv_weights, conv_biases, filter_sizes):
    """Pure-JAX f32 reference matching the PyTorch module semantics."""
    embedded = emb_table[text]                        # (B, L, D)
    B, L, D = embedded.shape
    outs = []
    for fs, w, b in zip(filter_sizes, conv_weights, conv_biases):
        w_kdf = jnp.transpose(w[:, 0, :, :], (1, 2, 0))          # (fs, D, F)
        T = L - fs + 1
        windows = jnp.stack([embedded[:, k:k + T, :] for k in range(fs)], axis=2)  # (B,T,fs,D)
        conved = jnp.einsum("btkd,kdf->btf", windows, w_kdf) + b.reshape(1, 1, -1)
        conved = jnp.maximum(conved, 0.0)
        outs.append(jnp.max(conved, axis=1))                     # (B, F)
    return jnp.concatenate(outs, axis=1)


if __name__ == "__main__":
    # Small, module-consistent shapes.
    vocab_size = 50
    embed_dim = 32
    n_filters = 8
    filter_sizes = (2, 3, 4)
    pad_idx = 0          # Constants.PAD
    batch = 2
    seq_len = 16

    key = jax.random.PRNGKey(0)
    k_emb, k_txt, *k_convs = jax.random.split(key, 2 + 2 * len(filter_sizes))

    # Embedding table; padding_idx row zeroed (as nn.Embedding(padding_idx=...) at init).
    emb_table = jax.random.normal(k_emb, (vocab_size, embed_dim), jnp.float32) * 0.1
    emb_table = emb_table.at[pad_idx].set(0.0)

    # Token ids.
    text = jax.random.randint(k_txt, (batch, seq_len), 0, vocab_size, dtype=jnp.int32)

    # Conv params in PyTorch layout: (n_filters, 1, fs, embed_dim) and (n_filters,).
    conv_weights, conv_biases = [], []
    for i, fs in enumerate(filter_sizes):
        kw, kb = k_convs[2 * i], k_convs[2 * i + 1]
        conv_weights.append(
            jax.random.normal(kw, (n_filters, 1, fs, embed_dim), jnp.float32) * 0.05)
        conv_biases.append(jax.random.normal(kb, (n_filters,), jnp.float32) * 0.05)

    out = textcnn_forward(text, emb_table, conv_weights, conv_biases, filter_sizes)
    out = jax.block_until_ready(out)

    ref = _reference_forward(text, emb_table, conv_weights, conv_biases, filter_sizes)

    assert out.shape == (batch, n_filters * len(filter_sizes)), out.shape
    # bf16 matmul operands with f32 accumulation -> small tolerance vs the f32 reference.
    max_err = float(jnp.max(jnp.abs(out - ref)))
    assert jnp.allclose(out, ref, atol=3e-3, rtol=3e-3), f"mismatch vs reference: {max_err}"

    print("KERNEL_OK")
</pallas_src>

<mosaic_0001>
module attributes {stable_mosaic.version = 11 : i64} {
  func.func @_textcnn_fused_kernel(%arg0: i32, %arg1: memref<8x19xi32, #tpu.memory_space<vmem>>, %arg2: memref<256x128xbf16, #tpu.memory_space<vmem>>, %arg3: memref<1x128xf32, #tpu.memory_space<vmem>>, %arg4: memref<1x128xi32, #tpu.memory_space<vmem>>, %arg5: memref<8x128xf32, #tpu.memory_space<vmem>>) attributes {dimension_semantics = [#tpu.dimension_semantics<parallel>], iteration_bounds = array<i64: 1>, scalar_prefetch = 0 : i64, scratch_operands = 0 : i64, tpu.core_type = #tpu.core_type<tc>, window_params = [{transform_indices = @transform_0, window_bounds = array<i64: 8, 19>}, {pipeline_mode = #tpu.pipeline_mode<synchronous>, transform_indices = @transform_1, window_bounds = array<i64: 256, 128>}, {pipeline_mode = #tpu.pipeline_mode<synchronous>, transform_indices = @transform_2, window_bounds = array<i64: 1, 128>}, {pipeline_mode = #tpu.pipeline_mode<synchronous>, transform_indices = @transform_3, window_bounds = array<i64: 1, 128>}, {transform_indices = @transform_4, window_bounds = array<i64: 8, 128>}]} {
    %c0 = arith.constant 0 : index
    %c0_0 = arith.constant 0 : index
    %0 = vector.load %arg1[%c0, %c0_0] : memref<8x19xi32, #tpu.memory_space<vmem>>, vector<8x19xi32>
    %1 = tpu.iota {dimensions = array<i32: 2>} : vector<8x16x256xi32>
    %2 = vector.extract_strided_slice %0 {offsets = [0, 0], sizes = [8, 16], strides = [1, 1]} : vector<8x19xi32> to vector<8x16xi32>
    %3 = vector.shape_cast %2 : vector<8x16xi32> to vector<8x16x1xi32>
    %4 = vector.broadcast %3 : vector<8x16x1xi32> to vector<8x16x256xi32>
    %5 = arith.cmpi eq, %1, %4 : vector<8x16x256xi32>
    %6 = vector.extract_strided_slice %0 {offsets = [0, 1], sizes = [8, 16], strides = [1, 1]} : vector<8x19xi32> to vector<8x16xi32>
    %7 = vector.shape_cast %6 : vector<8x16xi32> to vector<8x16x1xi32>
    %c64_i32 = arith.constant 64 : i32
    %8 = vector.broadcast %c64_i32 : i32 to vector<8x16x1xi32>
    %9 = arith.addi %7, %8 : vector<8x16x1xi32>
    %10 = vector.broadcast %9 : vector<8x16x1xi32> to vector<8x16x256xi32>
    %11 = arith.cmpi eq, %1, %10 : vector<8x16x256xi32>
    %12 = arith.ori %5, %11 : vector<8x16x256xi1>
    %13 = vector.extract_strided_slice %0 {offsets = [0, 2], sizes = [8, 16], strides = [1, 1]} : vector<8x19xi32> to vector<8x16xi32>
    %14 = vector.shape_cast %13 : vector<8x16xi32> to vector<8x16x1xi32>
    %c128_i32 = arith.constant 128 : i32
    %15 = vector.broadcast %c128_i32 : i32 to vector<8x16x1xi32>
    %16 = arith.addi %14, %15 : vector<8x16x1xi32>
    %17 = vector.broadcast %16 : vector<8x16x1xi32> to vector<8x16x256xi32>
    %18 = arith.cmpi eq, %1, %17 : vector<8x16x256xi32>
    %19 = arith.ori %12, %18 : vector<8x16x256xi1>
    %20 = vector.extract_strided_slice %0 {offsets = [0, 3], sizes = [8, 16], strides = [1, 1]} : vector<8x19xi32> to vector<8x16xi32>
    %21 = vector.shape_cast %20 : vector<8x16xi32> to vector<8x16x1xi32>
    %c192_i32 = arith.constant 192 : i32
    %22 = vector.broadcast %c192_i32 : i32 to vector<8x16x1xi32>
    %23 = arith.addi %21, %22 : vector<8x16x1xi32>
    %24 = vector.broadcast %23 : vector<8x16x1xi32> to vector<8x16x256xi32>
    %25 = arith.cmpi eq, %1, %24 : vector<8x16x256xi32>
    %26 = arith.ori %19, %25 : vector<8x16x256xi1>
    %27 = arith.extui %26 : vector<8x16x256xi1> to vector<8x16x256xi32>
    %28 = arith.sitofp %27 : vector<8x16x256xi32> to vector<8x16x256xf32>
    %29 = arith.truncf %28 : vector<8x16x256xf32> to vector<8x16x256xbf16>
    %30 = vector.shape_cast %29 : vector<8x16x256xbf16> to vector<128x256xbf16>
    %c0_1 = arith.constant 0 : index
    %c0_2 = arith.constant 0 : index
    %31 = vector.load %arg2[%c0_1, %c0_2] : memref<256x128xbf16, #tpu.memory_space<vmem>>, vector<256x128xbf16>
    %cst = arith.constant dense<0.000000e+00> : vector<128x128xf32>
    %32 = tpu.matmul %30, %31, %cst {dimension_numbers = #tpu.dot_dimension_numbers<[1], [0], [0], [1], [0, 0, 1, 1], [], []>} : vector<128x256xbf16>, vector<256x128xbf16>, vector<128x128xf32> -> vector<128x128xf32>
    %c0_3 = arith.constant 0 : index
    %c0_4 = arith.constant 0 : index
    %33 = vector.load %arg3[%c0_3, %c0_4] : memref<1x128xf32, #tpu.memory_space<vmem>>, vector<1x128xf32>
    %34 = vector.broadcast %33 : vector<1x128xf32> to vector<128x128xf32>
    %35 = arith.addf %32, %34 : vector<128x128xf32>
    %cst_5 = arith.constant 0.000000e+00 : f32
    %36 = vector.broadcast %cst_5 : f32 to vector<128x128xf32>
    %37 = arith.maximumf %35, %36 : vector<128x128xf32>
    %38 = vector.shape_cast %37 : vector<128x128xf32> to vector<8x16x128xf32>
    %39 = tpu.iota {dimensions = array<i32: 1>} : vector<8x16x128xi32>
    %c0_6 = arith.constant 0 : index
    %c0_7 = arith.constant 0 : index
    %40 = vector.load %arg4[%c0_6, %c0_7] : memref<1x128xi32, #tpu.memory_space<vmem>>, vector<1x128xi32>
    %41 = vector.shape_cast %40 : vector<1x128xi32> to vector<1x1x128xi32>
    %42 = vector.broadcast %41 : vector<1x1x128xi32> to vector<8x16x128xi32>
    %43 = arith.cmpi sle, %39, %42 : vector<8x16x128xi32>
    %cst_8 = arith.constant 0.000000e+00 : f32
    %44 = vector.broadcast %cst_8 : f32 to vector<8x16x128xf32>
    %45 = arith.select %43, %38, %44 : vector<8x16x128xi1>, vector<8x16x128xf32>
    %cst_9 = arith.constant dense<0xFF800000> : vector<8x128xf32>
    %46 = vector.multi_reduction <maximumf>, %45, %cst_9 [1] : vector<8x16x128xf32> to vector<8x128xf32>
    %c0_10 = arith.constant 0 : index
    %c0_11 = arith.constant 0 : index
    %47 = vector.load %arg5[%c0_10, %c0_11] : memref<8x128xf32, #tpu.memory_space<vmem>>, vector<8x128xf32>
    tpu.vector_store %arg5[%c0_10, %c0_11], %46 {strides = array<i32>} : memref<8x128xf32, #tpu.memory_space<vmem>>, vector<8x128xf32>,
    return
  }
  func.func @transform_0(%arg0: i32) -> (i32, i32) {
    %c0_i32 = arith.constant 0 : i32
    %c0_i32_0 = arith.constant 0 : i32
    return %arg0, %c0_i32 : i32, i32
  }
  func.func @transform_1(%arg0: i32) -> (i32, i32) {
    %c0_i32 = arith.constant 0 : i32
    %c0_i32_0 = arith.constant 0 : i32
    %c0_i32_1 = arith.constant 0 : i32
    return %c0_i32, %c0_i32_0 : i32, i32
  }
  func.func @transform_2(%arg0: i32) -> (i32, i32) {
    %c0_i32 = arith.constant 0 : i32
    %c0_i32_0 = arith.constant 0 : i32
    %c0_i32_1 = arith.constant 0 : i32
    return %c0_i32, %c0_i32_0 : i32, i32
  }
  func.func @transform_3(%arg0: i32) -> (i32, i32) {
    %c0_i32 = arith.constant 0 : i32
    %c0_i32_0 = arith.constant 0 : i32
    %c0_i32_1 = arith.constant 0 : i32
    return %c0_i32, %c0_i32_0 : i32, i32
  }
  func.func @transform_4(%arg0: i32) -> (i32, i32) {
    %c0_i32 = arith.constant 0 : i32
    %c0_i32_0 = arith.constant 0 : i32
    return %arg0, %c0_i32 : i32, i32
  }
}

</mosaic_0001>

<llo_original>
// kernel: tpu_custom_call.1
$region0: #{tpu_custom_call.1}
  #allocation0 [shape = 'u32[]', space=smem, size = 0x4, offset = 0x4, fixed_abs, tag = 'smem constant byte address 0x4 - core index']
  #allocation1 [shape = 'u32[144,128]{1,0:T(1,128)}', space=vmem, size = 0x12000, scoped, tag = 'internal scratch']
  %s0 = inlined_call_operand.hbm [shape: s32[8,19], index: 0, kind: input, shape index: {}]
  %s1 = inlined_call_operand.hbm [shape: bf16[256,128], index: 1, kind: input, shape index: {}]
  %s2 = inlined_call_operand.vmem [shape: f32[1,128], index: 2, kind: input, shape index: {}]
  %s3 = inlined_call_operand.vmem [shape: s32[1,128], index: 3, kind: input, shape index: {}]
  %s4 = inlined_call_operand.hbm [shape: f32[8,128], index: 4, kind: output, shape index: {}]
  %s5 = sld [smem:[#allocation0]]
  $region34: #{tpu_custom_call.1} parent=0
    _
  %s7 = ssub.s32 1, %s5
  %s8 = scalar_select 0, %s7, %s5
  $region1: #{tpu_custom_call.1} parent=0
    #allocation2 [shape = 'u8[4096]{0}', space=vmem, size = 0x1000, scoped, tag = 'input window, operand 0, single buffered']
    #allocation3 [shape = 's32[1]{0}', space=sflag, size = 0x4, scoped, tag = 'scoped memory for tpu_custom_call.1']
    #allocation4 [shape = 's32[1]{0}', space=sflag, size = 0x4, scoped, tag = 'scoped memory for tpu_custom_call.1']
    #allocation5 [shape = 'u8[65536]{0}', space=vmem, size = 0x10000, scoped, tag = 'input window, operand 1, single buffered']
    #allocation6 [shape = 's32[1]{0}', space=sflag, size = 0x4, scoped, tag = 'scoped memory for tpu_custom_call.1']
    #allocation7 [shape = 'u8[4096]{0}', space=vmem, size = 0x1000, scoped, tag = 'output window, operand 0, single buffered']
    %9 = vsyncpa [#allocation3], 0
    %10 = vsyncpa [#allocation6], 0
    %11 = vsyncpa [#allocation4], 0
    // Predicated region
    $region2: #{tpu_custom_call.1} parent=1 // pred_check
      _
    $region3: #{tpu_custom_call.1} parent=1 // pred_check_branch
      %13 = sbr.rel (0) target = $region5
    $region4: #{tpu_custom_call.1} parent=1 // pred_region
      %s15 = ssub.s32 128, 128
      %16 = vsyncadd [#allocation3], %s15
      %s18 = sshll.u32 [#allocation2], 4
      %s19 = int_to_ptr.vmem [resolvable:$true] %s18
      %21 = dma.hbm_to_vmem [thread:$0]  %s0, 128, %s19, [#allocation3]
    $region5: #{tpu_custom_call.1} parent=1 // pred_fallthru
      _
    // Predicated region
    $region6: #{tpu_custom_call.1} parent=1 // pred_check
      _
    $region7: #{tpu_custom_call.1} parent=1 // pred_check_branch
      %23 = sbr.rel (0) target = $region9
    $region8: #{tpu_custom_call.1} parent=1 // pred_region
      %s25 = ssub.s32 2048, 2048
      %26 = vsyncadd [#allocation6], %s25
      %s27 = sshll.u32 [#allocation5], 4
      %s28 = int_to_ptr.vmem [resolvable:$true] %s27
      %33 = dma.hbm_to_vmem [thread:$0]  %s1, 2048, %s28, [#allocation6], 64, 64, 4
    $region9: #{tpu_custom_call.1} parent=1 // pred_fallthru
      _
    // Predicated region
    $region10: #{tpu_custom_call.1} parent=1 // pred_check
      _
    $region11: #{tpu_custom_call.1} parent=1 // pred_check_branch
      %35 = sbr.rel (0) target = $region13
    $region12: #{tpu_custom_call.1} parent=1 // pred_region
      _
    $region13: #{tpu_custom_call.1} parent=1 // pred_fallthru
      _
    // Predicated region
    $region14: #{tpu_custom_call.1} parent=1 // pred_check
      _
    $region15: #{tpu_custom_call.1} parent=1 // pred_check_branch
      %37 = sbr.rel (0) target = $region17
    $region16: #{tpu_custom_call.1} parent=1 // pred_region
      _
    $region17: #{tpu_custom_call.1} parent=1 // pred_fallthru
      _
    // Predicated region
    $region18: #{tpu_custom_call.1} parent=1 // pred_check
      _
    $region19: #{tpu_custom_call.1} parent=1 // pred_check_branch
      %39 = sbr.rel (0) target = $region21
    $region20: #{tpu_custom_call.1} parent=1 // pred_region
      %40 = dma.done [#allocation3], 128
    $region21: #{tpu_custom_call.1} parent=1 // pred_fallthru
      _
    // Predicated region
    $region22: #{tpu_custom_call.1} parent=1 // pred_check
      _
    $region23: #{tpu_custom_call.1} parent=1 // pred_check_branch
      %42 = sbr.rel (0) target = $region25
    $region24: #{tpu_custom_call.1} parent=1 // pred_region
      %43 = dma.done [#allocation6], 2048
    $region25: #{tpu_custom_call.1} parent=1 // pred_fallthru
      _
    %v45 = vld [vmem:[#allocation2] sm:$0xff]
    %v46 = vlaneseq
    %v47 = vand.u32 %v46, 127
    %v48 = vadd.s32 %v47, 128
    %v49 = vlaneseq
    %v50 = vshrl.u32 %v49, 7
    %v51 = vsub.s32 0, %v50
    %v52 = vrot.slane %v45, %v51
    %54 = vbcast.lane.b32.xlu0 %v52, 256
    %v55 = vpop.permute.xlu0 %54
    %s57 = sor.u32 256, 8
    %58 = vbcast.lane.b32.xlu0 %v52, %s57
    %v59 = vpop.permute.xlu0 %58
    %v60 = vlaneseq
    %v61 = vshrl.u32 %v60, 7
    %v62 = vsub.s32 1, %v61
    %v63 = vrot.slane %v45, %v62
    %65 = vbcast.lane.b32.xlu0 %v63, 256
    %v66 = vpop.permute.xlu0 %65
    %s68 = sor.u32 256, 8
    %69 = vbcast.lane.b32.xlu0 %v63, %s68
    %v70 = vpop.permute.xlu0 %69
    %v71 = vlaneseq
    %v72 = vshrl.u32 %v71, 7
    %v73 = vsub.s32 2, %v72
    %v74 = vrot.slane %v45, %v73
    %76 = vbcast.lane.b32.xlu0 %v74, 256
    %v77 = vpop.permute.xlu0 %76
    %s79 = sor.u32 256, 8
    %80 = vbcast.lane.b32.xlu0 %v74, %s79
    %v81 = vpop.permute.xlu0 %80
    %v82 = vlaneseq
    %v83 = vshrl.u32 %v82, 7
    %v84 = vsub.s32 3, %v83
    %v85 = vrot.slane %v45, %v84
    %87 = vbcast.lane.b32.xlu0 %v85, 256
    %v88 = vpop.permute.xlu0 %87
    %s90 = sor.u32 256, 8
    %91 = vbcast.lane.b32.xlu0 %v85, %s90
    %v92 = vpop.permute.xlu0 %91
    %v93 = vlaneseq
    %v94 = vshrl.u32 %v93, 7
    %v95 = vsub.s32 4, %v94
    %v96 = vrot.slane %v45, %v95
    %98 = vbcast.lane.b32.xlu0 %v96, 256
    %v99 = vpop.permute.xlu0 %98
    %s101 = sor.u32 256, 8
    %102 = vbcast.lane.b32.xlu0 %v96, %s101
    %v103 = vpop.permute.xlu0 %102
    %v104 = vlaneseq
    %v105 = vshrl.u32 %v104, 7
    %v106 = vsub.s32 5, %v105
    %v107 = vrot.slane %v45, %v106
    %109 = vbcast.lane.b32.xlu0 %v107, 256
    %v110 = vpop.permute.xlu0 %109
    %s112 = sor.u32 256, 8
    %113 = vbcast.lane.b32.xlu0 %v107, %s112
    %v114 = vpop.permute.xlu0 %113
    %v115 = vlaneseq
    %v116 = vshrl.u32 %v115, 7
    %v117 = vsub.s32 6, %v116
    %v118 = vrot.slane %v45, %v117
    %120 = vbcast.lane.b32.xlu0 %v118, 256
    %v121 = vpop.permute.xlu0 %120
    %s123 = sor.u32 256, 8
    %124 = vbcast.lane.b32.xlu0 %v118, %s123
    %v125 = vpop.permute.xlu0 %124
    %v126 = vlaneseq
    %v127 = vshrl.u32 %v126, 7
    %v128 = vsub.s32 7, %v127
    %v129 = vrot.slane %v45, %v128
    %131 = vbcast.lane.b32.xlu0 %v129, 256
    %v132 = vpop.permute.xlu0 %131
    %s134 = sor.u32 256, 8
    %135 = vbcast.lane.b32.xlu0 %v129, %s134
    %v136 = vpop.permute.xlu0 %135
    %vm137 = vcmp.eq.s32.totalorder %v47, %v55
    %vm138 = vcmp.eq.s32.totalorder %v48, %v55
    %vm139 = vcmp.eq.s32.totalorder %v47, %v59
    %vm140 = vcmp.eq.s32.totalorder %v48, %v59
    %vm141 = vcmp.eq.s32.totalorder %v47, %v66
    %vm142 = vcmp.eq.s32.totalorder %v48, %v66
    %vm143 = vcmp.eq.s32.totalorder %v47, %v70
    %vm144 = vcmp.eq.s32.totalorder %v48, %v70
    %vm145 = vcmp.eq.s32.totalorder %v47, %v77
    %vm146 = vcmp.eq.s32.totalorder %v48, %v77
    %vm147 = vcmp.eq.s32.totalorder %v47, %v81
    %vm148 = vcmp.eq.s32.totalorder %v48, %v81
    %vm149 = vcmp.eq.s32.totalorder %v47, %v88
    %vm150 = vcmp.eq.s32.totalorder %v48, %v88
    %vm151 = vcmp.eq.s32.totalorder %v47, %v92
    %vm152 = vcmp.eq.s32.totalorder %v48, %v92
    %vm153 = vcmp.eq.s32.totalorder %v47, %v99
    %vm154 = vcmp.eq.s32.totalorder %v48, %v99
    %vm155 = vcmp.eq.s32.totalorder %v47, %v103
    %vm156 = vcmp.eq.s32.totalorder %v48, %v103
    %vm157 = vcmp.eq.s32.totalorder %v47, %v110
    %vm158 = vcmp.eq.s32.totalorder %v48, %v110
    %vm159 = vcmp.eq.s32.totalorder %v47, %v114
    %vm160 = vcmp.eq.s32.totalorder %v48, %v114
    %vm161 = vcmp.eq.s32.totalorder %v47, %v121
    %vm162 = vcmp.eq.s32.totalorder %v48, %v121
    %vm163 = vcmp.eq.s32.totalorder %v47, %v125
    %vm164 = vcmp.eq.s32.totalorder %v48, %v125
    %vm165 = vcmp.eq.s32.totalorder %v47, %v132
    %vm166 = vcmp.eq.s32.totalorder %v48, %v132
    %vm167 = vcmp.eq.s32.totalorder %v47, %v136
    %vm168 = vcmp.eq.s32.totalorder %v48, %v136
    %s170 = sor.u32 256, 1
    %171 = vbcast.lane.b32.xlu0 %v52, %s170
    %v172 = vpop.permute.xlu0 %171
    %s174 = sor.u32 256, 9
    %175 = vbcast.lane.b32.xlu0 %v52, %s174
    %v176 = vpop.permute.xlu0 %175
    %s178 = sor.u32 256, 1
    %179 = vbcast.lane.b32.xlu0 %v63, %s178
    %v180 = vpop.permute.xlu0 %179
    %s182 = sor.u32 256, 9
    %183 = vbcast.lane.b32.xlu0 %v63, %s182
    %v184 = vpop.permute.xlu0 %183
    %s186 = sor.u32 256, 1
    %187 = vbcast.lane.b32.xlu0 %v74, %s186
    %v188 = vpop.permute.xlu0 %187
    %s190 = sor.u32 256, 9
    %191 = vbcast.lane.b32.xlu0 %v74, %s190
    %v192 = vpop.permute.xlu0 %191
    %s194 = sor.u32 256, 1
    %195 = vbcast.lane.b32.xlu0 %v85, %s194
    %v196 = vpop.permute.xlu0 %195
    %s198 = sor.u32 256, 9
    %199 = vbcast.lane.b32.xlu0 %v85, %s198
    %v200 = vpop.permute.xlu0 %199
    %s202 = sor.u32 256, 1
    %203 = vbcast.lane.b32.xlu0 %v96, %s202
    %v204 = vpop.permute.xlu0 %203
    %s206 = sor.u32 256, 9
    %207 = vbcast.lane.b32.xlu0 %v96, %s206
    %v208 = vpop.permute.xlu0 %207
    %s210 = sor.u32 256, 1
    %211 = vbcast.lane.b32.xlu0 %v107, %s210
    %v212 = vpop.permute.xlu0 %211
    %s214 = sor.u32 256, 9
    %215 = vbcast.lane.b32.xlu0 %v107, %s214
    %v216 = vpop.permute.xlu0 %215
    %s218 = sor.u32 256, 1
    %219 = vbcast.lane.b32.xlu0 %v118, %s218
    %v220 = vpop.permute.xlu0 %219
    %s222 = sor.u32 256, 9
    %223 = vbcast.lane.b32.xlu0 %v118, %s222
    %v224 = vpop.permute.xlu0 %223
    %s226 = sor.u32 256, 1
    %227 = vbcast.lane.b32.xlu0 %v129, %s226
    %v228 = vpop.permute.xlu0 %227
    %s230 = sor.u32 256, 9
    %231 = vbcast.lane.b32.xlu0 %v129, %s230
    %v232 = vpop.permute.xlu0 %231
    %v233 = vadd.s32 %v172, 64
    %v234 = vadd.s32 %v176, 64
    %v235 = vadd.s32 %v180, 64
    %v236 = vadd.s32 %v184, 64
    %v237 = vadd.s32 %v188, 64
    %v238 = vadd.s32 %v192, 64
    %v239 = vadd.s32 %v196, 64
    %v240 = vadd.s32 %v200, 64
    %v241 = vadd.s32 %v204, 64
    %v242 = vadd.s32 %v208, 64
    %v243 = vadd.s32 %v212, 64
    %v244 = vadd.s32 %v216, 64
    %v245 = vadd.s32 %v220, 64
    %v246 = vadd.s32 %v224, 64
    %v247 = vadd.s32 %v228, 64
    %v248 = vadd.s32 %v232, 64
    %vm249 = vcmp.eq.s32.totalorder %v47, %v233
    %vm250 = vcmp.eq.s32.totalorder %v48, %v233
    %vm251 = vcmp.eq.s32.totalorder %v47, %v234
    %vm252 = vcmp.eq.s32.totalorder %v48, %v234
    %vm253 = vcmp.eq.s32.totalorder %v47, %v235
    %vm254 = vcmp.eq.s32.totalorder %v48, %v235
    %vm255 = vcmp.eq.s32.totalorder %v47, %v236
    %vm256 = vcmp.eq.s32.totalorder %v48, %v236
    %vm257 = vcmp.eq.s32.totalorder %v47, %v237
    %vm258 = vcmp.eq.s32.totalorder %v48, %v237
    %vm259 = vcmp.eq.s32.totalorder %v47, %v238
    %vm260 = vcmp.eq.s32.totalorder %v48, %v238
    %vm261 = vcmp.eq.s32.totalorder %v47, %v239
    %vm262 = vcmp.eq.s32.totalorder %v48, %v239
    %vm263 = vcmp.eq.s32.totalorder %v47, %v240
    %vm264 = vcmp.eq.s32.totalorder %v48, %v240
    %vm265 = vcmp.eq.s32.totalorder %v47, %v241
    %vm266 = vcmp.eq.s32.totalorder %v48, %v241
    %vm267 = vcmp.eq.s32.totalorder %v47, %v242
    %vm268 = vcmp.eq.s32.totalorder %v48, %v242
    %vm269 = vcmp.eq.s32.totalorder %v47, %v243
    %vm270 = vcmp.eq.s32.totalorder %v48, %v243
    %vm271 = vcmp.eq.s32.totalorder %v47, %v244
    %vm272 = vcmp.eq.s32.totalorder %v48, %v244
    %vm273 = vcmp.eq.s32.totalorder %v47, %v245
    %vm274 = vcmp.eq.s32.totalorder %v48, %v245
    %vm275 = vcmp.eq.s32.totalorder %v47, %v246
    %vm276 = vcmp.eq.s32.totalorder %v48, %v246
    %vm277 = vcmp.eq.s32.totalorder %v47, %v247
    %vm278 = vcmp.eq.s32.totalorder %v48, %v247
    %vm279 = vcmp.eq.s32.totalorder %v47, %v248
    %vm280 = vcmp.eq.s32.totalorder %v48, %v248
    %vm281 = vmor %vm137, %vm249
    %vm282 = vmor %vm138, %vm250
    %vm283 = vmor %vm139, %vm251
    %vm284 = vmor %vm140, %vm252
    %vm285 = vmor %vm141, %vm253
    %vm286 = vmor %vm142, %vm254
    %vm287 = vmor %vm143, %vm255
    %vm288 = vmor %vm144, %vm256
    %vm289 = vmor %vm145, %vm257
    %vm290 = vmor %vm146, %vm258
    %vm291 = vmor %vm147, %vm259
    %vm292 = vmor %vm148, %vm260
    %vm293 = vmor %vm149, %vm261
    %vm294 = vmor %vm150, %vm262
    %vm295 = vmor %vm151, %vm263
    %vm296 = vmor %vm152, %vm264
    %vm297 = vmor %vm153, %vm265
    %vm298 = vmor %vm154, %vm266
    %vm299 = vmor %vm155, %vm267
    %vm300 = vmor %vm156, %vm268
    %vm301 = vmor %vm157, %vm269
    %vm302 = vmor %vm158, %vm270
    %vm303 = vmor %vm159, %vm271
    %vm304 = vmor %vm160, %vm272
    %vm305 = vmor %vm161, %vm273
    %vm306 = vmor %vm162, %vm274
    %vm307 = vmor %vm163, %vm275
    %vm308 = vmor %vm164, %vm276
    %vm309 = vmor %vm165, %vm277
    %vm310 = vmor %vm166, %vm278
    %vm311 = vmor %vm167, %vm279
    %vm312 = vmor %vm168, %vm280
    %s314 = sor.u32 256, 2
    %315 = vbcast.lane.b32.xlu0 %v52, %s314
    %v316 = vpop.permute.xlu0 %315
    %s318 = sor.u32 256, 10
    %319 = vbcast.lane.b32.xlu0 %v52, %s318
    %v320 = vpop.permute.xlu0 %319
    %s322 = sor.u32 256, 2
    %323 = vbcast.lane.b32.xlu0 %v63, %s322
    %v324 = vpop.permute.xlu0 %323
    %s326 = sor.u32 256, 10
    %327 = vbcast.lane.b32.xlu0 %v63, %s326
    %v328 = vpop.permute.xlu0 %327
    %s330 = sor.u32 256, 2
    %331 = vbcast.lane.b32.xlu0 %v74, %s330
    %v332 = vpop.permute.xlu0 %331
    %s334 = sor.u32 256, 10
    %335 = vbcast.lane.b32.xlu0 %v74, %s334
    %v336 = vpop.permute.xlu0 %335
    %s338 = sor.u32 256, 2
    %339 = vbcast.lane.b32.xlu0 %v85, %s338
    %v340 = vpop.permute.xlu0 %339
    %s342 = sor.u32 256, 10
    %343 = vbcast.lane.b32.xlu0 %v85, %s342
    %v344 = vpop.permute.xlu0 %343
    %s346 = sor.u32 256, 2
    %347 = vbcast.lane.b32.xlu0 %v96, %s346
    %v348 = vpop.permute.xlu0 %347
    %s350 = sor.u32 256, 10
    %351 = vbcast.lane.b32.xlu0 %v96, %s350
    %v352 = vpop.permute.xlu0 %351
    %s354 = sor.u32 256, 2
    %355 = vbcast.lane.b32.xlu0 %v107, %s354
    %v356 = vpop.permute.xlu0 %355
    %s358 = sor.u32 256, 10
    %359 = vbcast.lane.b32.xlu0 %v107, %s358
    %v360 = vpop.permute.xlu0 %359
    %s362 = sor.u32 256, 2
    %363 = vbcast.lane.b32.xlu0 %v118, %s362
    %v364 = vpop.permute.xlu0 %363
    %s366 = sor.u32 256, 10
    %367 = vbcast.lane.b32.xlu0 %v118, %s366
    %v368 = vpop.permute.xlu0 %367
    %s370 = sor.u32 256, 2
    %371 = vbcast.lane.b32.xlu0 %v129, %s370
    %v372 = vpop.permute.xlu0 %371
    %s374 = sor.u32 256, 10
    %375 = vbcast.lane.b32.xlu0 %v129, %s374
    %v376 = vpop.permute.xlu0 %375
    %v377 = vadd.s32 %v316, 128
    %v378 = vadd.s32 %v320, 128
    %v379 = vadd.s32 %v324, 128
    %v380 = vadd.s32 %v328, 128
    %v381 = vadd.s32 %v332, 128
    %v382 = vadd.s32 %v336, 128
    %v383 = vadd.s32 %v340, 128
    %v384 = vadd.s32 %v344, 128
    %v385 = vadd.s32 %v348, 128
    %v386 = vadd.s32 %v352, 128
    %v387 = vadd.s32 %v356, 128
    %v388 = vadd.s32 %v360, 128
    %v389 = vadd.s32 %v364, 128
    %v390 = vadd.s32 %v368, 128
    %v391 = vadd.s32 %v372, 128
    %v392 = vadd.s32 %v376, 128
    %vm393 = vcmp.eq.s32.totalorder %v47, %v377
    %vm394 = vcmp.eq.s32.totalorder %v48, %v377
    %vm395 = vcmp.eq.s32.totalorder %v47, %v378
    %vm396 = vcmp.eq.s32.totalorder %v48, %v378
    %vm397 = vcmp.eq.s32.totalorder %v47, %v379
    %vm398 = vcmp.eq.s32.totalorder %v48, %v379
    %vm399 = vcmp.eq.s32.totalorder %v47, %v380
    %vm400 = vcmp.eq.s32.totalorder %v48, %v380
    %vm401 = vcmp.eq.s32.totalorder %v47, %v381
    %vm402 = vcmp.eq.s32.totalorder %v48, %v381
    %vm403 = vcmp.eq.s32.totalorder %v47, %v382
    %vm404 = vcmp.eq.s32.totalorder %v48, %v382
    %vm405 = vcmp.eq.s32.totalorder %v47, %v383
    %vm406 = vcmp.eq.s32.totalorder %v48, %v383
    %vm407 = vcmp.eq.s32.totalorder %v47, %v384
    %vm408 = vcmp.eq.s32.totalorder %v48, %v384
    %vm409 = vcmp.eq.s32.totalorder %v47, %v385
    %vm410 = vcmp.eq.s32.totalorder %v48, %v385
    %vm411 = vcmp.eq.s32.totalorder %v47, %v386
    %vm412 = vcmp.eq.s32.totalorder %v48, %v386
    %vm413 = vcmp.eq.s32.totalorder %v47, %v387
    %vm414 = vcmp.eq.s32.totalorder %v48, %v387
    %vm415 = vcmp.eq.s32.totalorder %v47, %v388
    %vm416 = vcmp.eq.s32.totalorder %v48, %v388
    %vm417 = vcmp.eq.s32.totalorder %v47, %v389
    %vm418 = vcmp.eq.s32.totalorder %v48, %v389
    %vm419 = vcmp.eq.s32.totalorder %v47, %v390
    %vm420 = vcmp.eq.s32.totalorder %v48, %v390
    %vm421 = vcmp.eq.s32.totalorder %v47, %v391
    %vm422 = vcmp.eq.s32.totalorder %v48, %v391
    %vm423 = vcmp.eq.s32.totalorder %v47, %v392
    %vm424 = vcmp.eq.s32.totalorder %v48, %v392
    %vm425 = vmor %vm281, %vm393
    %vm426 = vmor %vm282, %vm394
    %vm427 = vmor %vm283, %vm395
    %vm428 = vmor %vm284, %vm396
    %vm429 = vmor %vm285, %vm397
    %vm430 = vmor %vm286, %vm398
    %vm431 = vmor %vm287, %vm399
    %vm432 = vmor %vm288, %vm400
    %vm433 = vmor %vm289, %vm401
    %vm434 = vmor %vm290, %vm402
    %vm435 = vmor %vm291, %vm403
    %vm436 = vmor %vm292, %vm404
    %vm437 = vmor %vm293, %vm405
    %vm438 = vmor %vm294, %vm406
    %vm439 = vmor %vm295, %vm407
    %vm440 = vmor %vm296, %vm408
    %vm441 = vmor %vm297, %vm409
    %vm442 = vmor %vm298, %vm410
    %vm443 = vmor %vm299, %vm411
    %vm444 = vmor %vm300, %vm412
    %vm445 = vmor %vm301, %vm413
    %vm446 = vmor %vm302, %vm414
    %vm447 = vmor %vm303, %vm415
    %vm448 = vmor %vm304, %vm416
    %vm449 = vmor %vm305, %vm417
    %vm450 = vmor %vm306, %vm418
    %vm451 = vmor %vm307, %vm419
    %vm452 = vmor %vm308, %vm420
    %vm453 = vmor %vm309, %vm421
    %vm454 = vmor %vm310, %vm422
    %vm455 = vmor %vm311, %vm423
    %vm456 = vmor %vm312, %vm424
    %s458 = sor.u32 256, 3
    %459 = vbcast.lane.b32.xlu0 %v52, %s458
    %v460 = vpop.permute.xlu0 %459
    %s462 = sor.u32 256, 11
    %463 = vbcast.lane.b32.xlu0 %v52, %s462
    %v464 = vpop.permute.xlu0 %463
    %s466 = sor.u32 256, 3
    %467 = vbcast.lane.b32.xlu0 %v63, %s466
    %v468 = vpop.permute.xlu0 %467
    %s470 = sor.u32 256, 11
    %471 = vbcast.lane.b32.xlu0 %v63, %s470
    %v472 = vpop.permute.xlu0 %471
    %s474 = sor.u32 256, 3
    %475 = vbcast.lane.b32.xlu0 %v74, %s474
    %v476 = vpop.permute.xlu0 %475
    %s478 = sor.u32 256, 11
    %479 = vbcast.lane.b32.xlu0 %v74, %s478
    %v480 = vpop.permute.xlu0 %479
    %s482 = sor.u32 256, 3
    %483 = vbcast.lane.b32.xlu0 %v85, %s482
    %v484 = vpop.permute.xlu0 %483
    %s486 = sor.u32 256, 11
    %487 = vbcast.lane.b32.xlu0 %v85, %s486
    %v488 = vpop.permute.xlu0 %487
    %s490 = sor.u32 256, 3
    %491 = vbcast.lane.b32.xlu0 %v96, %s490
    %v492 = vpop.permute.xlu0 %491
    %s494 = sor.u32 256, 11
    %495 = vbcast.lane.b32.xlu0 %v96, %s494
    %v496 = vpop.permute.xlu0 %495
    %s498 = sor.u32 256, 3
    %499 = vbcast.lane.b32.xlu0 %v107, %s498
    %v500 = vpop.permute.xlu0 %499
    %s502 = sor.u32 256, 11
    %503 = vbcast.lane.b32.xlu0 %v107, %s502
    %v504 = vpop.permute.xlu0 %503
    %s506 = sor.u32 256, 3
    %507 = vbcast.lane.b32.xlu0 %v118, %s506
    %v508 = vpop.permute.xlu0 %507
    %s510 = sor.u32 256, 11
    %511 = vbcast.lane.b32.xlu0 %v118, %s510
    %v512 = vpop.permute.xlu0 %511
    %s514 = sor.u32 256, 3
    %515 = vbcast.lane.b32.xlu0 %v129, %s514
    %v516 = vpop.permute.xlu0 %515
    %s518 = sor.u32 256, 11
    %519 = vbcast.lane.b32.xlu0 %v129, %s518
    %v520 = vpop.permute.xlu0 %519
    %v521 = vadd.s32 %v460, 192
    %v522 = vadd.s32 %v464, 192
    %v523 = vadd.s32 %v468, 192
    %v524 = vadd.s32 %v472, 192
    %v525 = vadd.s32 %v476, 192
    %v526 = vadd.s32 %v480, 192
    %v527 = vadd.s32 %v484, 192
    %v528 = vadd.s32 %v488, 192
    %v529 = vadd.s32 %v492, 192
    %v530 = vadd.s32 %v496, 192
    %v531 = vadd.s32 %v500, 192
    %v532 = vadd.s32 %v504, 192
    %v533 = vadd.s32 %v508, 192
    %v534 = vadd.s32 %v512, 192
    %v535 = vadd.s32 %v516, 192
    %v536 = vadd.s32 %v520, 192
    %vm537 = vcmp.eq.s32.totalorder %v47, %v521
    %vm538 = vcmp.eq.s32.totalorder %v48, %v521
    %vm539 = vcmp.eq.s32.totalorder %v47, %v522
    %vm540 = vcmp.eq.s32.totalorder %v48, %v522
    %vm541 = vcmp.eq.s32.totalorder %v47, %v523
    %vm542 = vcmp.eq.s32.totalorder %v48, %v523
    %vm543 = vcmp.eq.s32.totalorder %v47, %v524
    %vm544 = vcmp.eq.s32.totalorder %v48, %v524
    %vm545 = vcmp.eq.s32.totalorder %v47, %v525
    %vm546 = vcmp.eq.s32.totalorder %v48, %v525
    %vm547 = vcmp.eq.s32.totalorder %v47, %v526
    %vm548 = vcmp.eq.s32.totalorder %v48, %v526
    %vm549 = vcmp.eq.s32.totalorder %v47, %v527
    %vm550 = vcmp.eq.s32.totalorder %v48, %v527
    %vm551 = vcmp.eq.s32.totalorder %v47, %v528
    %vm552 = vcmp.eq.s32.totalorder %v48, %v528
    %vm553 = vcmp.eq.s32.totalorder %v47, %v529
    %vm554 = vcmp.eq.s32.totalorder %v48, %v529
    %vm555 = vcmp.eq.s32.totalorder %v47, %v530
    %vm556 = vcmp.eq.s32.totalorder %v48, %v530
    %vm557 = vcmp.eq.s32.totalorder %v47, %v531
    %vm558 = vcmp.eq.s32.totalorder %v48, %v531
    %vm559 = vcmp.eq.s32.totalorder %v47, %v532
    %vm560 = vcmp.eq.s32.totalorder %v48, %v532
    %vm561 = vcmp.eq.s32.totalorder %v47, %v533
    %vm562 = vcmp.eq.s32.totalorder %v48, %v533
    %vm563 = vcmp.eq.s32.totalorder %v47, %v534
    %vm564 = vcmp.eq.s32.totalorder %v48, %v534
    %vm565 = vcmp.eq.s32.totalorder %v47, %v535
    %vm566 = vcmp.eq.s32.totalorder %v48, %v535
    %vm567 = vcmp.eq.s32.totalorder %v47, %v536
    %vm568 = vcmp.eq.s32.totalorder %v48, %v536
    %vm569 = vmor %vm425, %vm537
    %vm570 = vmor %vm426, %vm538
    %vm571 = vmor %vm427, %vm539
    %vm572 = vmor %vm428, %vm540
    %vm573 = vmor %vm429, %vm541
    %vm574 = vmor %vm430, %vm542
    %vm575 = vmor %vm431, %vm543
    %vm576 = vmor %vm432, %vm544
    %vm577 = vmor %vm433, %vm545
    %vm578 = vmor %vm434, %vm546
    %vm579 = vmor %vm435, %vm547
    %vm580 = vmor %vm436, %vm548
    %vm581 = vmor %vm437, %vm549
    %vm582 = vmor %vm438, %vm550
    %vm583 = vmor %vm439, %vm551
    %vm584 = vmor %vm440, %vm552
    %vm585 = vmor %vm441, %vm553
    %vm586 = vmor %vm442, %vm554
    %vm587 = vmor %vm443, %vm555
    %vm588 = vmor %vm444, %vm556
    %vm589 = vmor %vm445, %vm557
    %vm590 = vmor %vm446, %vm558
    %vm591 = vmor %vm447, %vm559
    %vm592 = vmor %vm448, %vm560
    %vm593 = vmor %vm449, %vm561
    %vm594 = vmor %vm450, %vm562
    %vm595 = vmor %vm451, %vm563
    %vm596 = vmor %vm452, %vm564
    %vm597 = vmor %vm453, %vm565
    %vm598 = vmor %vm454, %vm566
    %vm599 = vmor %vm455, %vm567
    %vm600 = vmor %vm456, %vm568
    %v601 = vsel %vm569, 1, 0
    %v602 = vsel %vm570, 1, 0
    %v603 = vsel %vm571, 1, 0
    %v604 = vsel %vm572, 1, 0
    %v605 = vsel %vm573, 1, 0
    %v606 = vsel %vm574, 1, 0
    %v607 = vsel %vm575, 1, 0
    %v608 = vsel %vm576, 1, 0
    %v609 = vsel %vm577, 1, 0
    %v610 = vsel %vm578, 1, 0
    %v611 = vsel %vm579, 1, 0
    %v612 = vsel %vm580, 1, 0
    %v613 = vsel %vm581, 1, 0
    %v614 = vsel %vm582, 1, 0
    %v615 = vsel %vm583, 1, 0
    %v616 = vsel %vm584, 1, 0
    %v617 = vsel %vm585, 1, 0
    %v618 = vsel %vm586, 1, 0
    %v619 = vsel %vm587, 1, 0
    %v620 = vsel %vm588, 1, 0
    %v621 = vsel %vm589, 1, 0
    %v622 = vsel %vm590, 1, 0
    %v623 = vsel %vm591, 1, 0
    %v624 = vsel %vm592, 1, 0
    %v625 = vsel %vm593, 1, 0
    %v626 = vsel %vm594, 1, 0
    %v627 = vsel %vm595, 1, 0
    %v628 = vsel %vm596, 1, 0
    %v629 = vsel %vm597, 1, 0
    %v630 = vsel %vm598, 1, 0
    %v631 = vsel %vm599, 1, 0
    %v632 = vsel %vm600, 1, 0
    %v633 = vcvt.s32.f32 %v601
    %v634 = vcvt.s32.f32 %v602
    %v635 = vcvt.s32.f32 %v603
    %v636 = vcvt.s32.f32 %v604
    %v637 = vcvt.s32.f32 %v605
    %v638 = vcvt.s32.f32 %v606
    %v639 = vcvt.s32.f32 %v607
    %v640 = vcvt.s32.f32 %v608
    %v641 = vcvt.s32.f32 %v609
    %v642 = vcvt.s32.f32 %v610
    %v643 = vcvt.s32.f32 %v611
    %v644 = vcvt.s32.f32 %v612
    %v645 = vcvt.s32.f32 %v613
    %v646 = vcvt.s32.f32 %v614
    %v647 = vcvt.s32.f32 %v615
    %v648 = vcvt.s32.f32 %v616
    %v649 = vcvt.s32.f32 %v617
    %v650 = vcvt.s32.f32 %v618
    %v651 = vcvt.s32.f32 %v619
    %v652 = vcvt.s32.f32 %v620
    %v653 = vcvt.s32.f32 %v621
    %v654 = vcvt.s32.f32 %v622
    %v655 = vcvt.s32.f32 %v623
    %v656 = vcvt.s32.f32 %v624
    %v657 = vcvt.s32.f32 %v625
    %v658 = vcvt.s32.f32 %v626
    %v659 = vcvt.s32.f32 %v627
    %v660 = vcvt.s32.f32 %v628
    %v661 = vcvt.s32.f32 %v629
    %v662 = vcvt.s32.f32 %v630
    %v663 = vcvt.s32.f32 %v631
    %v664 = vcvt.s32.f32 %v632
    %v665 = vpack.c.bf16 %v635, %v633
    %v666 = vpack.c.bf16 %v636, %v634
    %v667 = vpack.c.bf16 %v639, %v637
    %v668 = vpack.c.bf16 %v640, %v638
    %v669 = vpack.c.bf16 %v643, %v641
    %v670 = vpack.c.bf16 %v644, %v642
    %v671 = vpack.c.bf16 %v647, %v645
    %v672 = vpack.c.bf16 %v648, %v646
    %v673 = vpack.c.bf16 %v651, %v649
    %v674 = vpack.c.bf16 %v652, %v650
    %v675 = vpack.c.bf16 %v655, %v653
    %v676 = vpack.c.bf16 %v656, %v654
    %v677 = vpack.c.bf16 %v659, %v657
    %v678 = vpack.c.bf16 %v660, %v658
    %v679 = vpack.c.bf16 %v663, %v661
    %v680 = vpack.c.bf16 %v664, %v662
    %v681 = vld [vmem:[#allocation5] sm:$0xf]
    %v682 = vld [vmem:[#allocation5 + $0x4] sm:$0xf]
    %v683 = vld [vmem:[#allocation5 + $0x8] sm:$0xf]
    %v684 = vld [vmem:[#allocation5 + $0xc] sm:$0xf]
    %v685 = vld [vmem:[#allocation5 + $0x10] sm:$0xf]
    %v686 = vld [vmem:[#allocation5 + $0x14] sm:$0xf]
    %v687 = vld [vmem:[#allocation5 + $0x18] sm:$0xf]
    %v688 = vld [vmem:[#allocation5 + $0x1c] sm:$0xf]
    %v689 = vld [vmem:[#allocation5 + $0x20] sm:$0xf]
    %v690 = vld [vmem:[#allocation5 + $0x24] sm:$0xf]
    %v691 = vld [vmem:[#allocation5 + $0x28] sm:$0xf]
    %v692 = vld [vmem:[#allocation5 + $0x2c] sm:$0xf]
    %v693 = vld [vmem:[#allocation5 + $0x30] sm:$0xf]
    %v694 = vld [vmem:[#allocation5 + $0x34] sm:$0xf]
    %v695 = vld [vmem:[#allocation5 + $0x38] sm:$0xf]
    %v696 = vld [vmem:[#allocation5 + $0x3c] sm:$0xf]
    %v697 = vld [vmem:[#allocation5 + $0x40] sm:$0xf]
    %v698 = vld [vmem:[#allocation5 + $0x44] sm:$0xf]
    %v699 = vld [vmem:[#allocation5 + $0x48] sm:$0xf]
    %v700 = vld [vmem:[#allocation5 + $0x4c] sm:$0xf]
    %v701 = vld [vmem:[#allocation5 + $0x50] sm:$0xf]
    %v702 = vld [vmem:[#allocation5 + $0x54] sm:$0xf]
    %v703 = vld [vmem:[#allocation5 + $0x58] sm:$0xf]
    %v704 = vld [vmem:[#allocation5 + $0x5c] sm:$0xf]
    %v705 = vld [vmem:[#allocation5 + $0x60] sm:$0xf]
    %v706 = vld [vmem:[#allocation5 + $0x64] sm:$0xf]
    %v707 = vld [vmem:[#allocation5 + $0x68] sm:$0xf]
    %v708 = vld [vmem:[#allocation5 + $0x6c] sm:$0xf]
    %v709 = vld [vmem:[#allocation5 + $0x70] sm:$0xf]
    %v710 = vld [vmem:[#allocation5 + $0x74] sm:$0xf]
    %v711 = vld [vmem:[#allocation5 + $0x78] sm:$0xf]
    %v712 = vld [vmem:[#allocation5 + $0x7c] sm:$0xf]
    %v713 = vld [vmem:[%s2] sm:$0x1]
    %v715 = vlaneseq
    %v716 = vshrl.u32 %v715, 7
    %v717 = vsub.s32 0, %v716
    %v718 = vrot.slane %v713, %v717
    %v752 = vunpack.c.l.b16 %v681
    %v753 = vunpack.c.l.b16 %v682
    %v754 = vunpack.c.l.b16 %v683
    %v755 = vunpack.c.l.b16 %v684
    %v756 = vunpack.c.l.b16 %v685
    %v757 = vunpack.c.l.b16 %v686
    %v758 = vunpack.c.l.b16 %v687
    %v759 = vunpack.c.l.b16 %v688
    %v760 = vunpack.c.l.b16 %v689
    %v761 = vunpack.c.l.b16 %v690
    %v762 = vunpack.c.l.b16 %v691
    %v763 = vunpack.c.l.b16 %v692
    %v764 = vunpack.c.l.b16 %v693
    %v765 = vunpack.c.l.b16 %v694
    %v766 = vunpack.c.l.b16 %v695
    %v767 = vunpack.c.l.b16 %v696
    %v768 = vunpack.c.l.b16 %v697
    %v769 = vunpack.c.l.b16 %v698
    %v770 = vunpack.c.l.b16 %v699
    %v771 = vunpack.c.l.b16 %v700
    %v772 = vunpack.c.l.b16 %v701
    %v773 = vunpack.c.l.b16 %v702
    %v774 = vunpack.c.l.b16 %v703
    %v775 = vunpack.c.l.b16 %v704
    %v776 = vunpack.c.l.b16 %v705
    %v777 = vunpack.c.l.b16 %v706
    %v778 = vunpack.c.l.b16 %v707
    %v779 = vunpack.c.l.b16 %v708
    %v780 = vunpack.c.l.b16 %v709
    %v781 = vunpack.c.l.b16 %v710
    %v782 = vunpack.c.l.b16 %v711
    %v783 = vunpack.c.l.b16 %v712
    %v784 = vpack.c.b16 %v753, %v752
    %v785 = vpack.c.b16 %v755, %v754
    %v786 = vpack.c.b16 %v757, %v756
    %v787 = vpack.c.b16 %v759, %v758
    %v788 = vpack.c.b16 %v761, %v760
    %v789 = vpack.c.b16 %v763, %v762
    %v790 = vpack.c.b16 %v765, %v764
    %v791 = vpack.c.b16 %v767, %v766
    %v792 = vpack.c.b16 %v769, %v768
    %v793 = vpack.c.b16 %v771, %v770
    %v794 = vpack.c.b16 %v773, %v772
    %v795 = vpack.c.b16 %v775, %v774
    %v796 = vpack.c.b16 %v777, %v776
    %v797 = vpack.c.b16 %v779, %v778
    %v798 = vpack.c.b16 %v781, %v780
    %v799 = vpack.c.b16 %v783, %v782
    %816 = vmatprep.subr.bf16.mxu0 0
    %817 = vmatpush1.bf16.msra.mxu0 %v791
    %818 = vmatprep.subr.bf16.mxu0 0
    %819 = vmatpush1.bf16.msra.mxu0 %v790
    %820 = vmatprep.subr.bf16.mxu0 0
    %821 = vmatpush1.bf16.msra.mxu0 %v789
    %822 = vmatprep.subr.bf16.mxu0 0
    %823 = vmatpush1.bf16.msra.mxu0 %v788
    %824 = vmatprep.subr.bf16.mxu0 0
    %825 = vmatpush1.bf16.msra.mxu0 %v787
    %826 = vmatprep.subr.bf16.mxu0 0
    %827 = vmatpush1.bf16.msra.mxu0 %v786
    %828 = vmatprep.subr.bf16.mxu0 0
    %829 = vmatpush1.bf16.msra.mxu0 %v785
    %830 = vmatprep.subr.bf16.mxu0 0
    %831 = vmatpush1.bf16.msra.mxu0 %v784
    %832 = vmatprep.subr.bf16.mxu0 0
    %833 = vmatpush2.bf16.msra.mxu0 %v799
    %834 = vmatprep.subr.bf16.mxu0 0
    %835 = vmatpush2.bf16.msra.mxu0 %v798
    %836 = vmatprep.subr.bf16.mxu0 0
    %837 = vmatpush2.bf16.msra.mxu0 %v797
    %838 = vmatprep.subr.bf16.mxu0 0
    %839 = vmatpush2.bf16.msra.mxu0 %v796
    %840 = vmatprep.subr.bf16.mxu0 0
    %841 = vmatpush2.bf16.msra.mxu0 %v795
    %842 = vmatprep.subr.bf16.mxu0 0
    %843 = vmatpush2.bf16.msra.mxu0 %v794
    %844 = vmatprep.subr.bf16.mxu0 0
    %845 = vmatpush2.bf16.msra.mxu0 %v793
    %846 = vmatprep.subr.bf16.mxu0 0
    %847 = vmatpush2.bf16.msra.mxu0 %v792
    %848 = vmatprep.mubr.bf16.mxu0 %v666
    %849 = vmatmul.mubr.bf16.gmra.mxu0 %v665
    %v850 = vpop.f32.mrf.mxu0
    %v851 = vadd.f32 %v718, %v850
    %v852 = vpop.f32.mrf.mxu0
    %v853 = vpop.f32.mrf.mxu0
    %v854 = vadd.f32 %v718, %v853
    %v855 = vpop.f32.mrf.mxu0
    %856 = vmatprep.mubr.bf16.mxu0 %v668
    %857 = vmatmul.mubr.bf16.gmra.mxu0 %v667
    %v858 = vpop.f32.mrf.mxu0
    %v859 = vadd.f32 %v718, %v858
    %v860 = vpop.f32.mrf.mxu0
    %v861 = vpop.f32.mrf.mxu0
    %v862 = vadd.f32 %v718, %v861
    %v863 = vpop.f32.mrf.mxu0
    %864 = vmatprep.mubr.bf16.mxu0 %v670
    %865 = vmatmul.mubr.bf16.gmra.mxu0 %v669
    %v866 = vpop.f32.mrf.mxu0
    %v867 = vadd.f32 %v718, %v866
    %v868 = vpop.f32.mrf.mxu0
    %v869 = vpop.f32.mrf.mxu0
    %v870 = vadd.f32 %v718, %v869
    %v871 = vpop.f32.mrf.mxu0
    %872 = vmatprep.mubr.bf16.mxu0 %v672
    %873 = vmatmul.mubr.bf16.gmra.mxu0 %v671
    %v874 = vpop.f32.mrf.mxu0
    %v875 = vadd.f32 %v718, %v874
    %v876 = vpop.f32.mrf.mxu0
    %v877 = vpop.f32.mrf.mxu0
    %v878 = vadd.f32 %v718, %v877
    %v879 = vpop.f32.mrf.mxu0
    %880 = vmatprep.mubr.bf16.mxu0 %v674
    %881 = vmatmul.mubr.bf16.gmra.mxu0 %v673
    %v882 = vpop.f32.mrf.mxu0
    %v883 = vadd.f32 %v718, %v882
    %v884 = vpop.f32.mrf.mxu0
    %v885 = vpop.f32.mrf.mxu0
    %v886 = vadd.f32 %v718, %v885
    %v887 = vpop.f32.mrf.mxu0
    %888 = vmatprep.mubr.bf16.mxu0 %v676
    %889 = vmatmul.mubr.bf16.gmra.mxu0 %v675
    %v890 = vpop.f32.mrf.mxu0
    %v891 = vadd.f32 %v718, %v890
    %v892 = vpop.f32.mrf.mxu0
    %v893 = vpop.f32.mrf.mxu0
    %v894 = vadd.f32 %v718, %v893
    %v895 = vpop.f32.mrf.mxu0
    %896 = vmatprep.mubr.bf16.mxu0 %v678
    %897 = vmatmul.mubr.bf16.gmra.mxu0 %v677
    %v898 = vpop.f32.mrf.mxu0
    %v899 = vadd.f32 %v718, %v898
    %v900 = vpop.f32.mrf.mxu0
    %v901 = vpop.f32.mrf.mxu0
    %v902 = vadd.f32 %v718, %v901
    %v903 = vpop.f32.mrf.mxu0
    %904 = vmatprep.mubr.bf16.mxu0 %v680
    %905 = vmatmul.mubr.bf16.gmra.mxu0 %v679
    %v906 = vpop.f32.mrf.mxu0
    %v907 = vadd.f32 %v718, %v906
    %v908 = vpop.f32.mrf.mxu0
    %v909 = vpop.f32.mrf.mxu0
    %v910 = vadd.f32 %v718, %v909
    %v911 = vpop.f32.mrf.mxu0
    %912 = vdwg.mxu0
    %v913 = vmax.f32 %v851, 0.0
    %v914 = vmax.f32 %v854, 0.0
    %v915 = vmax.f32 %v859, 0.0
    %v916 = vmax.f32 %v862, 0.0
    %v917 = vmax.f32 %v867, 0.0
    %v918 = vmax.f32 %v870, 0.0
    %v919 = vmax.f32 %v875, 0.0
    %v920 = vmax.f32 %v878, 0.0
    %v921 = vmax.f32 %v883, 0.0
    %v922 = vmax.f32 %v886, 0.0
    %v923 = vmax.f32 %v891, 0.0
    %v924 = vmax.f32 %v894, 0.0
    %v925 = vmax.f32 %v899, 0.0
    %v926 = vmax.f32 %v902, 0.0
    %v927 = vmax.f32 %v907, 0.0
    %v928 = vmax.f32 %v910, 0.0
    %v929 = vlaneseq
    %v930 = vshrl.u32 %v929, 7
    %v931 = vadd.s32 %v930, 8
    %v932 = vld [vmem:[%s3] sm:$0x1]
    %v933 = vlaneseq
    %v934 = vshrl.u32 %v933, 7
    %v935 = vsub.s32 0, %v934
    %v936 = vrot.slane %v932, %v935
    %vm937 = vcmp.le.s32.totalorder %v930, %v936
    %vm938 = vcmp.le.s32.totalorder %v931, %v936
    %v939 = vsel %vm937, %v913, 0.0
    %v940 = vsel %vm938, %v914, 0.0
    %v941 = vsel %vm937, %v915, 0.0
    %v942 = vsel %vm938, %v916, 0.0
    %v943 = vsel %vm937, %v917, 0.0
    %v944 = vsel %vm938, %v918, 0.0
    %v945 = vsel %vm937, %v919, 0.0
    %v946 = vsel %vm938, %v920, 0.0
    %v947 = vsel %vm937, %v921, 0.0
    %v948 = vsel %vm938, %v922, 0.0
    %v949 = vsel %vm937, %v923, 0.0
    %v950 = vsel %vm938, %v924, 0.0
    %v951 = vsel %vm937, %v925, 0.0
    %v952 = vsel %vm938, %v926, 0.0
    %v953 = vsel %vm937, %v927, 0.0
    %v954 = vsel %vm938, %v928, 0.0
    %v955 = vmax.f32 %v939, %v940
    %v956 = vrot.slane %v955, 4
    %v957 = vmax.f32 %v955, %v956
    %v958 = vrot.slane %v957, 2
    %v959 = vmax.f32 %v957, %v958
    %v960 = vrot.slane %v959, 1
    %v961 = vmax.f32 %v959, %v960
    %v962 = vmax.f32 %v941, %v942
    %v963 = vrot.slane %v962, 4
    %v964 = vmax.f32 %v962, %v963
    %v965 = vrot.slane %v964, 2
    %v966 = vmax.f32 %v964, %v965
    %v967 = vrot.slane %v966, 1
    %v968 = vmax.f32 %v966, %v967
    %v969 = vmax.f32 %v943, %v944
    %v970 = vrot.slane %v969, 4
    %v971 = vmax.f32 %v969, %v970
    %v972 = vrot.slane %v971, 2
    %v973 = vmax.f32 %v971, %v972
    %v974 = vrot.slane %v973, 1
    %v975 = vmax.f32 %v973, %v974
    %v976 = vmax.f32 %v945, %v946
    %v977 = vrot.slane %v976, 4
    %v978 = vmax.f32 %v976, %v977
    %v979 = vrot.slane %v978, 2
    %v980 = vmax.f32 %v978, %v979
    %v981 = vrot.slane %v980, 1
    %v982 = vmax.f32 %v980, %v981
    %v983 = vmax.f32 %v947, %v948
    %v984 = vrot.slane %v983, 4
    %v985 = vmax.f32 %v983, %v984
    %v986 = vrot.slane %v985, 2
    %v987 = vmax.f32 %v985, %v986
    %v988 = vrot.slane %v987, 1
    %v989 = vmax.f32 %v987, %v988
    %v990 = vmax.f32 %v949, %v950
    %v991 = vrot.slane %v990, 4
    %v992 = vmax.f32 %v990, %v991
    %v993 = vrot.slane %v992, 2
    %v994 = vmax.f32 %v992, %v993
    %v995 = vrot.slane %v994, 1
    %v996 = vmax.f32 %v994, %v995
    %v997 = vmax.f32 %v951, %v952
    %v998 = vrot.slane %v997, 4
    %v999 = vmax.f32 %v997, %v998
    %v1000 = vrot.slane %v999, 2
    %v1001 = vmax.f32 %v999, %v1000
    %v1002 = vrot.slane %v1001, 1
    %v1003 = vmax.f32 %v1001, %v1002
    %v1004 = vmax.f32 %v953, %v954
    %v1005 = vrot.slane %v1004, 4
    %v1006 = vmax.f32 %v1004, %v1005
    %v1007 = vrot.slane %v1006, 2
    %v1008 = vmax.f32 %v1006, %v1007
    %v1009 = vrot.slane %v1008, 1
    %v1010 = vmax.f32 %v1008, %v1009
    %vm1019 = vcmask 1041409
    %v1020 = vsel %vm1019, %v968, %v961
    %vm1021 = vcmask 1042434
    %v1022 = vsel %vm1021, %v975, %v1020
    %vm1023 = vcmask 1043459
    %v1024 = vsel %vm1023, %v982, %v1022
    %vm1025 = vcmask 1044484
    %v1026 = vsel %vm1025, %v989, %v1024
    %vm1027 = vcmask 1045509
    %v1028 = vsel %vm1027, %v996, %v1026
    %vm1029 = vcmask 1046534
    %v1030 = vsel %vm1029, %v1003, %v1028
    %vm1031 = vcmask 1047559
    %v1032 = vsel %vm1031, %v1010, %v1030
    %1034 = vst [vmem:[#allocation7] sm:$0xff] %v1032
    // Predicated region
    $region26: #{tpu_custom_call.1} parent=1 // pred_check
      _
    $region27: #{tpu_custom_call.1} parent=1 // pred_check_branch
      %1036 = sbr.rel (0) target = $region29
    $region28: #{tpu_custom_call.1} parent=1 // pred_region
      %s1038 = ssub.s32 128, 128
      %1039 = vsyncadd [#allocation4], %s1038
      %s1041 = sshll.u32 [#allocation7], 4
      %s1042 = int_to_ptr.vmem [resolvable:$true] %s1041
      %1044 = dma.vmem_to_hbm [thread:$0]  %s1042, 128, %s4, [#allocation4]
    $region29: #{tpu_custom_call.1} parent=1 // pred_fallthru
      _
    // Predicated region
    $region30: #{tpu_custom_call.1} parent=1 // pred_check
      _
    $region31: #{tpu_custom_call.1} parent=1 // pred_check_branch
      %1046 = sbr.rel (0) target = $region33
    $region32: #{tpu_custom_call.1} parent=1 // pred_region
      %1047 = dma.done [#allocation4], 128
    $region33: #{tpu_custom_call.1} parent=1 // pred_fallthru
      _
    %1048 = vsyncpa [#allocation3], 1
    %1049 = vsyncpa [#allocation6], 1
    %1050 = vsyncpa [#allocation4], 1

</llo_original>
